<compile_context>
chip_gen: v7x
topology: tpu7x:2x2x1
jax: 0.10.0
libtpu: 0.0.40
codegen_flags: <defaults>
</compile_context>

<pallas_src>
import functools
import math

import jax
import jax.numpy as jnp
from jax.experimental import pallas as pl
from jax.experimental.pallas import tpu as pltpu


# ----------------------------------------------------------------------------
# pltpu.roll direction probe (runs once, cached).  The conv taps need
# out[p] = x[p + d]; whether that is shift = -d or shift = +d depends on the
# roll convention, so measure it with a tiny kernel instead of assuming.
# ----------------------------------------------------------------------------
@functools.cache
def _roll_matches_jnp_roll() -> bool:
    def _probe(x_ref, o_ref):
        o_ref[...] = pltpu.roll(x_ref[...], shift=1, axis=1)

    x = jnp.broadcast_to(jnp.arange(128, dtype=jnp.float32), (8, 128))
    y = pl.pallas_call(_probe,
                       out_shape=jax.ShapeDtypeStruct((8, 128), jnp.float32))(x)
    # jnp.roll convention: out[i] = x[(i - shift) % n]  ->  y[0, 0] == 127
    return bool(jax.device_get(y[0, 0]) == 127.0)


# ----------------------------------------------------------------------------
# Fused CEBlock kernel.
# Layout: channels on sublanes, flattened (n, i, j) spatial index on lanes.
#   a_ref  : SMEM (3,)             PReLU slopes [down, relu1, relu2]
#   patch_ref : (4*Cin, T)  bf16   space-to-depth input patches (lane tile)
#   wd_ref : (Cout, 4*Cin)  bf16   2x2 down-conv weight, flattened
#   w1_ref : (9, Cout, Cout) bf16  conv1 per-tap weights, t = ky*3 + kx
#   w2_ref : (9, Cout, Cout) bf16  conv2 per-tap weights
#   b_ref  : (Cout, 3)  f32        biases [down, conv1, conv2]
#   o_ref  : (Cout, T)  f32        output tile, T = imgs_per_tile * Ho * Wo
# ----------------------------------------------------------------------------
def _ce_block_kernel(a_ref, patch_ref, wd_ref, w1_ref, w2_ref, b_ref, o_ref,
                     *, ho, wo, roll_like_jnp):
    cout, t_len = o_ref.shape
    hw = ho * wo
    f32, bf16 = jnp.float32, jnp.bfloat16
    sign = -1 if roll_like_jnp else 1

    # Hoisted scalars / bias columns (review: minor item 10).
    a_down, a_1, a_2 = a_ref[0], a_ref[1], a_ref[2]
    b_down, b_1, b_2 = b_ref[:, 0:1], b_ref[:, 1:2], b_ref[:, 2:3]

    # ---- down: 2x2 / stride-2 conv as one matmul + bias + PReLU ------------
    feat = jnp.dot(wd_ref[...], patch_ref[...], preferred_element_type=f32)
    feat = feat + b_down
    feat = jnp.where(feat >= 0.0, feat, a_down * feat)            # (cout, T) f32

    # ---- 3x3 tap validity masks, rebuilt in-kernel (nothing streamed) ------
    # Lane tiles are whole-image multiples, so the mask only depends on the
    # within-image position q = lane % (ho*wo).
    q = jax.lax.broadcasted_iota(jnp.int32, (1, t_len), 1) % hw
    row, col = q // wo, q % wo
    masks = []
    for t in range(9):
        dy, dx = t // 3 - 1, t % 3 - 1
        ok = ((row + dy >= 0) & (row + dy < ho) &
              (col + dx >= 0) & (col + dx < wo))
        masks.append(ok.astype(bf16))                             # (1, T), 0/1 exact

    def conv3x3(x_f32, w_ref_, b_col):
        # 3x3 "same" conv: 9 lane-rotated taps (XLU) -> bf16 mask multiply
        # (VPU) -> tiny (cout x cout) MXU dot, accumulated in f32.  No im2col
        # buffer is ever materialized (no concatenate, no scratch stores).
        x = x_f32.astype(bf16)                                    # one cast, (cout, T)
        acc = jnp.zeros((cout, t_len), f32)
        for t in range(9):
            dy, dx = t // 3 - 1, t % 3 - 1
            d = dy * wo + dx
            if d == 0:
                tap = x                                           # centre tap, mask == 1
            else:
                tap = pltpu.roll(x, shift=(sign * d) % t_len, axis=1) * masks[t]
            acc = acc + jnp.dot(w_ref_[t], tap, preferred_element_type=f32)
        return acc + b_col

    # ---- ResBlock: conv1 + PReLU, conv2 + identity residual + PReLU --------
    out1 = conv3x3(feat, w1_ref, b_1)
    out1 = jnp.where(out1 >= 0.0, out1, a_1 * out1)

    out2 = conv3x3(out1, w2_ref, b_2) + feat          # residual never leaves VMEM
    o_ref[...] = jnp.where(out2 >= 0.0, out2, a_2 * out2)


# ----------------------------------------------------------------------------
# Wrapper: tiny layout prep + one pallas_call over whole-image lane tiles.
# ----------------------------------------------------------------------------
@functools.partial(jax.jit, static_argnames=("imgs_per_tile", "roll_like_jnp"))
def _ce_block_lane_dense(x_nchw, params, *, imgs_per_tile, roll_like_jnp):
    N, Cin, H, W = x_nchw.shape
    Cout = params["w_down"].shape[0]
    Ho, Wo = H // 2, W // 2
    HW = Ho * Wo
    S = N * HW
    K0 = 4 * Cin
    T = imgs_per_tile * HW
    assert N % imgs_per_tile == 0 and T % 128 == 0, (N, imgs_per_tile, T)
    # TODO(synk): shapes where no whole-image tile is a multiple of 128 lanes
    # need masked partial lane tiles; not required for this module's usage.

    # Space-to-depth input patches in the lane-dense (4*Cin, N*Ho*Wo) layout.
    xr = x_nchw.reshape(N, Cin, Ho, 2, Wo, 2)
    patches = (xr.transpose(1, 3, 5, 0, 2, 4)
                 .reshape(K0, S).astype(jnp.bfloat16))

    # Weights in MXU-friendly form (bf16 operands, f32 accumulation).
    wd = params["w_down"].reshape(Cout, K0).astype(jnp.bfloat16)           # (Cout, 4*Cin)
    w1t = (params["w1"].transpose(2, 3, 0, 1)
           .reshape(9, Cout, Cout).astype(jnp.bfloat16))                   # per-tap
    w2t = (params["w2"].transpose(2, 3, 0, 1)
           .reshape(9, Cout, Cout).astype(jnp.bfloat16))
    b_all = jnp.stack([params["b_down"], params["b1"], params["b2"]],
                      axis=1).astype(jnp.float32)                          # (Cout, 3)
    a_all = jnp.stack([params["a_down"], params["a1"],
                       params["a2"]]).astype(jnp.float32)                  # (3,) -> SMEM

    kernel = functools.partial(_ce_block_kernel, ho=Ho, wo=Wo,
                               roll_like_jnp=roll_like_jnp)
    out = pl.pallas_call(
        kernel,
        out_shape=jax.ShapeDtypeStruct((Cout, S), jnp.float32),
        grid=(S // T,),
        in_specs=[
            pl.BlockSpec(memory_space=pltpu.MemorySpace.SMEM),    # PReLU slopes
            pl.BlockSpec((K0, T), lambda g: (0, g)),              # patches lane tile
            pl.BlockSpec((Cout, K0), lambda g: (0, 0)),           # w_down
            pl.BlockSpec((9, Cout, Cout), lambda g: (0, 0, 0)),   # conv1 taps
            pl.BlockSpec((9, Cout, Cout), lambda g: (0, 0, 0)),   # conv2 taps
            pl.BlockSpec((Cout, 3), lambda g: (0, 0)),            # biases
        ],
        out_specs=pl.BlockSpec((Cout, T), lambda g: (0, g)),
        compiler_params=pltpu.CompilerParams(
            dimension_semantics=("parallel",),           # shard tiles across TCs
            vmem_limit_bytes=32 * 1024 * 1024),          # v7x-safe scoped budget
    )(a_all, patches, wd, w1t, w2t, b_all)
    return out                                           # (Cout, N*Ho*Wo) lane-dense


def ce_block_forward(x_nchw, params, *, imgs_per_tile=None, max_tile_lanes=1024):
    """CEBlock forward, NCHW in / NCHW out (thin layout shim around the kernel)."""
    N, _, H, W = x_nchw.shape
    HW = (H // 2) * (W // 2)
    if imgs_per_tile is None:
        k = 128 // math.gcd(HW, 128)      # smallest whole-image 128-lane multiple
        while N % (2 * k) == 0 and 2 * k * HW <= max_tile_lanes:
            k *= 2                        # grow toward the HBM-roofline sweet spot
        imgs_per_tile = k
    if N % imgs_per_tile != 0:
        raise ValueError(f"batch {N} not divisible by imgs_per_tile {imgs_per_tile}")

    out = _ce_block_lane_dense(x_nchw, params, imgs_per_tile=imgs_per_tile,
                               roll_like_jnp=_roll_matches_jnp_roll())
    # TODO(synk): keep the lane-dense (Cout, N*Ho*Wo) layout for the consumer;
    # this NCHW transpose exists only to match the PyTorch-facing interface.
    Cout = out.shape[0]
    return out.reshape(Cout, N, H // 2, W // 2).transpose(1, 0, 2, 3)


# ----------------------------------------------------------------------------
# Parameters (PyTorch OIHW layout) and pure-JAX reference for verification
# ----------------------------------------------------------------------------
def init_params(key, in_ch, out_ch):
    k = jax.random.split(key, 6)
    s = 0.1
    return {
        "w_down": s * jax.random.normal(k[0], (out_ch, in_ch, 2, 2), jnp.float32),
        "b_down": s * jax.random.normal(k[1], (out_ch,), jnp.float32),
        "a_down": jnp.asarray(0.25, jnp.float32),   # nn.PReLU default init
        "w1": s * jax.random.normal(k[2], (out_ch, out_ch, 3, 3), jnp.float32),
        "b1": s * jax.random.normal(k[3], (out_ch,), jnp.float32),
        "a1": jnp.asarray(0.25, jnp.float32),
        "w2": s * jax.random.normal(k[4], (out_ch, out_ch, 3, 3), jnp.float32),
        "b2": s * jax.random.normal(k[5], (out_ch,), jnp.float32),
        "a2": jnp.asarray(0.25, jnp.float32),
    }


def ce_block_reference(x_nchw, params):
    dn = ("NCHW", "OIHW", "NCHW")
    prec = jax.lax.Precision.HIGHEST

    def prelu(v, a):
        return jnp.where(v >= 0, v, a * v)

    f = jax.lax.conv_general_dilated(x_nchw, params["w_down"], (2, 2), "VALID",
                                     dimension_numbers=dn, precision=prec)
    f = prelu(f + params["b_down"].reshape(1, -1, 1, 1), params["a_down"])
    o = jax.lax.conv_general_dilated(f, params["w1"], (1, 1), "SAME",
                                     dimension_numbers=dn, precision=prec)
    o = prelu(o + params["b1"].reshape(1, -1, 1, 1), params["a1"])
    o2 = jax.lax.conv_general_dilated(o, params["w2"], (1, 1), "SAME",
                                      dimension_numbers=dn, precision=prec)
    o2 = o2 + params["b2"].reshape(1, -1, 1, 1) + f
    return prelu(o2, params["a2"])


if __name__ == "__main__":
    key = jax.random.PRNGKey(0)
    k_x, k_p = jax.random.split(key)

    N, in_ch, out_ch, H, W = 4, 4, 8, 16, 16
    x = jax.random.normal(k_x, (N, in_ch, H, W), jnp.float32)   # NCHW like PyTorch
    params = init_params(k_p, in_ch, out_ch)

    # imgs_per_tile=2 -> T=128 lanes, grid=(2,): exercises the multi-tile path.
    out = jax.block_until_ready(ce_block_forward(x, params, imgs_per_tile=2))
    ref = jax.block_until_ready(ce_block_reference(x, params))

    assert out.shape == (N, out_ch, H // 2, W // 2), out.shape
    max_err = float(jnp.max(jnp.abs(out - ref)))
    # kernel uses bf16 MXU operands with f32 accumulation -> loosened tolerance
    assert jnp.allclose(out, ref, atol=2e-2, rtol=2e-2), max_err

    # Default (bigger) tile must give the same answer.
    out2 = jax.block_until_ready(ce_block_forward(x, params))
    assert jnp.allclose(out2, ref, atol=2e-2, rtol=2e-2)

    print("KERNEL_OK")
</pallas_src>

<mosaic_0001>
module attributes {stable_mosaic.version = 11 : i64} {
  func.func @_probe(%arg0: memref<8x128xf32, #tpu.memory_space<vmem>>, %arg1: memref<8x128xf32, #tpu.memory_space<vmem>>) attributes {dimension_semantics = [], scalar_prefetch = 0 : i64, scratch_operands = 0 : i64, tpu.core_type = #tpu.core_type<tc>} {
    %c0 = arith.constant 0 : index
    %c0_0 = arith.constant 0 : index
    %0 = vector.load %arg0[%c0, %c0_0] : memref<8x128xf32, #tpu.memory_space<vmem>>, vector<8x128xf32>
    %c1_i32 = arith.constant 1 : i32
    %1 = tpu.dynamic_rotate %0 by %c1_i32 dim 1 : vector<8x128xf32>, i32 -> vector<8x128xf32>
    %c0_1 = arith.constant 0 : index
    %c0_2 = arith.constant 0 : index
    %2 = vector.load %arg1[%c0_1, %c0_2] : memref<8x128xf32, #tpu.memory_space<vmem>>, vector<8x128xf32>
    tpu.vector_store %arg1[%c0_1, %c0_2], %1 {strides = array<i32>} : memref<8x128xf32, #tpu.memory_space<vmem>>, vector<8x128xf32>,
    return
  }
}

</mosaic_0001>

<llo_original>
// kernel: tpu_custom_call.1
$region0: #{tpu_custom_call.1}
  #allocation0 [shape = 'u32[]', space=smem, size = 0x4, offset = 0x4, fixed_abs, tag = 'smem constant byte address 0x4 - core index']
  #allocation1 [shape = 'u32[144,128]{1,0:T(1,128)}', space=vmem, size = 0x12000, scoped, tag = 'internal scratch']
  %s0 = inlined_call_operand.hbm [shape: f32[8,128], index: 0, kind: input, shape index: {}]
  %s1 = inlined_call_operand.hbm [shape: f32[8,128], index: 1, kind: output, shape index: {}]
  %s2 = sld [smem:[#allocation0]]
  $region18: #{tpu_custom_call.1} parent=0
    _
  %s4 = ssub.s32 1, %s2
  %s5 = scalar_select 0, %s4, %s2
  $region1: #{tpu_custom_call.1} parent=0
    #allocation2 [shape = 'u8[4096]{0}', space=vmem, size = 0x1000, scoped, tag = 'input window, operand 0, single buffered']
    #allocation3 [shape = 's32[1]{0}', space=sflag, size = 0x4, scoped, tag = 'scoped memory for tpu_custom_call.1']
    #allocation4 [shape = 's32[1]{0}', space=sflag, size = 0x4, scoped, tag = 'scoped memory for tpu_custom_call.1']
    #allocation5 [shape = 'u8[4096]{0}', space=vmem, size = 0x1000, scoped, tag = 'output window, operand 0, single buffered']
    %6 = vsyncpa [#allocation3], 0
    %7 = vsyncpa [#allocation4], 0
    // Predicated region
    $region2: #{tpu_custom_call.1} parent=1 // pred_check
      _
    $region3: #{tpu_custom_call.1} parent=1 // pred_check_branch
      %9 = sbr.rel (0) target = $region5
    $region4: #{tpu_custom_call.1} parent=1 // pred_region
      %s11 = ssub.s32 128, 128
      %12 = vsyncadd [#allocation3], %s11
      %s14 = sshll.u32 [#allocation2], 4
      %s15 = int_to_ptr.vmem [resolvable:$true] %s14
      %17 = dma.hbm_to_vmem [thread:$0]  %s0, 128, %s15, [#allocation3]
    $region5: #{tpu_custom_call.1} parent=1 // pred_fallthru
      _
    // Predicated region
    $region6: #{tpu_custom_call.1} parent=1 // pred_check
      _
    $region7: #{tpu_custom_call.1} parent=1 // pred_check_branch
      %19 = sbr.rel (0) target = $region9
    $region8: #{tpu_custom_call.1} parent=1 // pred_region
      %20 = dma.done [#allocation3], 128
    $region9: #{tpu_custom_call.1} parent=1 // pred_fallthru
      _
    %v21 = vld [vmem:[#allocation2] sm:$0xff]
    %22 = vrot.lane.b32.xlu0 %v21, 1
    %v23 = vpop.permute.xlu0 %22
    %24 = vst [vmem:[#allocation5] sm:$0xff] %v23
    // Predicated region
    $region10: #{tpu_custom_call.1} parent=1 // pred_check
      _
    $region11: #{tpu_custom_call.1} parent=1 // pred_check_branch
      %26 = sbr.rel (0) target = $region13
    $region12: #{tpu_custom_call.1} parent=1 // pred_region
      %s28 = ssub.s32 128, 128
      %29 = vsyncadd [#allocation4], %s28
      %s31 = sshll.u32 [#allocation5], 4
      %s32 = int_to_ptr.vmem [resolvable:$true] %s31
      %34 = dma.vmem_to_hbm [thread:$0]  %s32, 128, %s1, [#allocation4]
    $region13: #{tpu_custom_call.1} parent=1 // pred_fallthru
      _
    // Predicated region
    $region14: #{tpu_custom_call.1} parent=1 // pred_check
      _
    $region15: #{tpu_custom_call.1} parent=1 // pred_check_branch
      %36 = sbr.rel (0) target = $region17
    $region16: #{tpu_custom_call.1} parent=1 // pred_region
      %37 = dma.done [#allocation4], 128
    $region17: #{tpu_custom_call.1} parent=1 // pred_fallthru
      _
    %38 = vsyncpa [#allocation3], 1
    %39 = vsyncpa [#allocation4], 1

</llo_original>
